<compile_context>
chip_gen: v6e
topology: v6e:2x2x1
jax: 0.10.0
libtpu: 0.0.40
codegen_flags: <defaults>
</compile_context>

<pallas_src>
import functools
import math

import jax
import jax.numpy as jnp
from jax.experimental import pallas as pl
from jax.experimental.pallas import tpu as pltpu

NEG_SLOPE = 0.01  # nn.LeakyReLU default negative slope


def _leaky_relu(x):
    return jnp.where(x > 0, x, NEG_SLOPE * x)


def _cdiv(a, b):
    return -(-a // b)


@functools.lru_cache(maxsize=None)
def _vmem_budget_bytes():
    """Scoped-VMEM budget: 75% of physical per-core VMEM (v5e/v6e 128 MiB,
    v7x 64 MiB), capped at 100 MiB.  Falls back to the most conservative
    generation (v7x, 64 MiB -> 48 MiB budget) if the query is unavailable."""
    try:
        cap = int(pltpu.get_tpu_info().vmem_capacity_bytes)
    except Exception:
        cap = 64 << 20
    return int(min(cap * 3 // 4, 100 << 20))


def _choose_tile_b(b_work, state_dim, hidden_dim, vmem_budget):
    """Batch-tile size derived from the VMEM budget (not a fixed cap).

    Accounting (bytes):
      * resident W1/W2 (bf16) + bias/w3 rows -- counted double-buffered so the
        budget still holds even if the single-buffer hint is not honoured.
      * per row: double-buffered f32 x tile, in-kernel bf16 cast of x,
        f32 h1/h2 temps (+ bf16 h1), lane-dense (1, TB) output blocks.
    Prefers multiples of 256 (full 256x256 MXU passes on v6e/v7x, also a
    multiple of the 128-lane / v5e 128x128 MXU granularity) and keeps >= 2 grid
    steps whenever the batch allows so both v7x TensorCores get work.
    """
    # TODO(synk): for very large state_dim (W1 alone blowing the VMEM budget),
    # add a K-reduction grid axis over state_dim instead of shrinking TB.
    weight_bytes = 2 * (2 * (state_dim * hidden_dim + hidden_dim * hidden_dim)
                        + 4 * (3 * hidden_dim + 1))
    per_row = 10 * state_dim + 14 * hidden_dim + 16
    avail = vmem_budget - weight_bytes - (4 << 20)        # 4 MiB headroom
    tb = max(avail // per_row, 8)
    tb = min(tb, 4096, b_work)
    tb = min(tb, max(_cdiv(b_work, 2), 8))                # >= 2 grid steps if possible
    if tb >= 256:
        tb = (tb // 256) * 256
    else:
        tb = max((tb // 8) * 8, 8)                        # f32 sublane multiple
    return int(tb)


def _critic_mlp_kernel(x_ref, w1_ref, b1_ref, w2_ref, b2_ref, w3_ref, b3_ref,
                       o_ref):
    # x tile arrives as f32 straight from HBM (no wrapper-side convert pass);
    # round to bf16 on the VPU right before feeding the MXU.
    x = x_ref[...].astype(jnp.bfloat16)

    # Layer 1: bf16 x bf16 MXU matmul with f32 accumulate; bias + LeakyReLU in
    # f32 on the VPU (bf16 elementwise is slow/unsupported on v5e).
    h1 = jnp.dot(x, w1_ref[...], preferred_element_type=jnp.float32) + b1_ref[...]
    h1 = _leaky_relu(h1)

    # Layer 2: same bf16-in / f32-accumulate pattern.
    h2 = jnp.dot(h1.astype(jnp.bfloat16), w2_ref[...],
                 preferred_element_type=jnp.float32) + b2_ref[...]
    h2 = _leaky_relu(h2)

    # Layer 3 (H -> 1): an N=1 matmul wastes a full MXU pass, so keep it as an
    # f32 VPU multiply + lane reduction.  Relayout the (TB, 1) column into a
    # lane-dense (1, TB) row (XLU is idle here) so the store is an unmasked
    # dense vst and the output writeback is one contiguous DMA.
    col = jnp.sum(h2 * w3_ref[...], axis=-1, keepdims=True) + b3_ref[...]
    o_ref[...] = jnp.transpose(col).astype(o_ref.dtype)


@functools.partial(jax.jit, static_argnames=("use_pipeline_mode",))
def _forward(obs, params, use_pipeline_mode):
    w1, b1, w2, b2, w3, b3 = params
    hidden_dim = w1.shape[1]

    B = obs.shape[0]
    x = obs.reshape(B, -1)                 # matches obs.reshape(obs.size(0), -1)
    state_dim = x.shape[1]

    # Weight-side prep (tiny, reused across every grid step): bf16 MXU operands,
    # f32 bias rows, f32 w3 row used on the VPU.
    w1_bf = w1.astype(jnp.bfloat16)
    w2_bf = w2.astype(jnp.bfloat16)
    b1_f = b1.reshape(1, hidden_dim).astype(jnp.float32)
    b2_f = b2.reshape(1, hidden_dim).astype(jnp.float32)
    w3_row = w3.reshape(1, hidden_dim).astype(jnp.float32)
    b3_f = b3.reshape(1, 1).astype(jnp.float32)

    # No batch zero-padding: the grid uses cdiv and Pallas handles the ragged
    # last tile (rows are independent; junk rows are sliced off below).  Only
    # B < 8 is padded up to one 8-row tile to avoid sub-sublane blocks.
    if B < 8:
        x = jnp.pad(x, ((0, 8 - B), (0, 0)))
    b_work = x.shape[0]

    vmem_budget = _vmem_budget_bytes()
    tb = _choose_tile_b(b_work, state_dim, hidden_dim, vmem_budget)
    num_tiles = _cdiv(b_work, tb)

    def const_spec(shape):
        # Block index never changes -> a second buffer is pure VMEM waste.
        if use_pipeline_mode:
            return pl.BlockSpec(shape, lambda i: (0, 0),
                                pipeline_mode=pl.Buffered(1))
        return pl.BlockSpec(shape, lambda i: (0, 0))

    # x tiles: default double buffer; deepen to 3 only when tiles are tiny and
    # the per-step DMA issue latency isn't hidden behind the two short matmuls.
    x_tile_bytes = tb * state_dim * 4
    if use_pipeline_mode and x_tile_bytes <= (512 << 10) and num_tiles >= 4:
        x_spec = pl.BlockSpec((tb, state_dim), lambda i: (i, 0),
                              pipeline_mode=pl.Buffered(3))
    else:
        x_spec = pl.BlockSpec((tb, state_dim), lambda i: (i, 0))

    cost = pl.CostEstimate(
        flops=int(2 * b_work * (state_dim * hidden_dim
                                + hidden_dim * hidden_dim + hidden_dim)),
        transcendentals=0,
        bytes_accessed=int(
            b_work * state_dim * 4                                    # x (f32)
            + (state_dim * hidden_dim + hidden_dim * hidden_dim) * 2  # W1, W2 bf16
            + (3 * hidden_dim + 1) * 4                                # b1,b2,w3,b3
            + num_tiles * tb * 4),                                    # output
    )

    out = pl.pallas_call(
        _critic_mlp_kernel,
        out_shape=jax.ShapeDtypeStruct((num_tiles, tb), jnp.float32),
        grid=(num_tiles,),
        in_specs=[
            x_spec,                                   # x (pipelined batch tiles)
            const_spec((state_dim, hidden_dim)),      # W1 (bf16, VMEM resident)
            const_spec((1, hidden_dim)),              # b1
            const_spec((hidden_dim, hidden_dim)),     # W2 (bf16, VMEM resident)
            const_spec((1, hidden_dim)),              # b2
            const_spec((1, hidden_dim)),              # w3 row (f32, VPU)
            const_spec((1, 1)),                       # b3
        ],
        out_specs=pl.BlockSpec((1, tb), lambda i: (i, 0)),  # lane-dense rows
        compiler_params=pltpu.CompilerParams(
            dimension_semantics=("parallel",),        # megacore sharding on v7x
            vmem_limit_bytes=int(vmem_budget),
        ),
        cost_estimate=cost,
    )(x, w1_bf, b1_f, w2_bf, b2_f, w3_row, b3_f)

    # (num_tiles, TB) lane-dense slab -> (B, 1) column.
    return out.reshape(num_tiles * tb, 1)[:B]


_PIPELINE_MODE_OK = True  # flipped off once if this build rejects pl.Buffered hints


def critic_attn_v_forward(obs, params):
    """obs: (B, ...) float32 -> (B, 1) float32. Matches Critic_Attn_V.forward."""
    global _PIPELINE_MODE_OK
    try:
        return _forward(obs, params, use_pipeline_mode=_PIPELINE_MODE_OK)
    except Exception:
        if not _PIPELINE_MODE_OK:
            raise
        # Fall back to default double buffering (numerics identical) if the
        # per-operand buffer-count hint is not supported by this Mosaic build.
        _PIPELINE_MODE_OK = False
        return _forward(obs, params, use_pipeline_mode=False)


def init_params(key, state_dim, hidden_dim):
    """Deterministic init mimicking PyTorch nn.Linear default (uniform +-1/sqrt(fan_in))."""
    def linear(key, fan_in, fan_out):
        kw, kb = jax.random.split(key)
        bound = 1.0 / jnp.sqrt(jnp.float32(fan_in))
        # stored as (in, out) so the kernel does x @ W
        w = jax.random.uniform(kw, (fan_in, fan_out), jnp.float32, -bound, bound)
        b = jax.random.uniform(kb, (1, fan_out), jnp.float32, -bound, bound)
        return w, b

    k1, k2, k3 = jax.random.split(key, 3)
    w1, b1 = linear(k1, state_dim, hidden_dim)
    w2, b2 = linear(k2, hidden_dim, hidden_dim)
    w3, b3 = linear(k3, hidden_dim, 1)
    return (w1, b1, w2, b2, w3, b3)


def reference_forward(obs, params, *, bf16_inputs=False):
    """Pure-JAX reference. bf16_inputs=True mirrors the kernel's bf16-operand /
    f32-accumulate matmuls (bf16 rounding of operands, f32 math)."""
    w1, b1, w2, b2, w3, b3 = params
    x = obs.reshape(obs.shape[0], -1)

    def rnd(a):
        return a.astype(jnp.bfloat16).astype(jnp.float32) if bf16_inputs else a

    h1 = _leaky_relu(rnd(x) @ rnd(w1) + b1)
    h2 = _leaky_relu(rnd(h1) @ rnd(w2) + b2)
    return h2 @ w3 + b3


if __name__ == "__main__":
    key = jax.random.PRNGKey(0)
    k_obs, k_par = jax.random.split(key)

    # Small shapes consistent with the module: batch=2, obs (2, 4, 16)
    # -> state_dim = 64, hidden_dim = 32.
    B, C, S = 2, 4, 16
    state_dim = C * S
    hidden_dim = 32

    obs = jax.random.normal(k_obs, (B, C, S), dtype=jnp.float32)
    params = init_params(k_par, state_dim, hidden_dim)

    out = critic_attn_v_forward(obs, params)
    out = jax.block_until_ready(out)
    assert out.shape == (B, 1), out.shape

    # Tight check vs a reference applying the same bf16 operand rounding;
    # tolerance scales with sqrt(H) to absorb accumulation-order differences.
    tol = 1e-4 * max(1.0, math.sqrt(hidden_dim / 8.0))
    ref_bf16 = reference_forward(obs, params, bf16_inputs=True)
    assert jnp.allclose(out, ref_bf16, atol=tol, rtol=tol), (out, ref_bf16)

    # Loose sanity check vs the pure-f32 reference (bf16 operand rounding only).
    ref_f32 = reference_forward(obs, params, bf16_inputs=False)
    assert jnp.allclose(out, ref_f32, atol=5e-2, rtol=5e-2), (out, ref_f32)

    print("KERNEL_OK")
</pallas_src>

<mosaic_0001>
module attributes {stable_mosaic.version = 11 : i64} {
  func.func @_critic_mlp_kernel(%arg0: i32, %arg1: memref<8x64xf32, #tpu.memory_space<vmem>>, %arg2: memref<64x32xbf16, #tpu.memory_space<vmem>>, %arg3: memref<1x32xf32, #tpu.memory_space<vmem>>, %arg4: memref<32x32xbf16, #tpu.memory_space<vmem>>, %arg5: memref<1x32xf32, #tpu.memory_space<vmem>>, %arg6: memref<1x32xf32, #tpu.memory_space<vmem>>, %arg7: memref<1x1xf32, #tpu.memory_space<vmem>>, %arg8: memref<1x8xf32, #tpu.memory_space<vmem>>) attributes {dimension_semantics = [#tpu.dimension_semantics<parallel>], iteration_bounds = array<i64: 1>, scalar_prefetch = 0 : i64, scratch_operands = 0 : i64, tpu.core_type = #tpu.core_type<tc>, window_params = [{transform_indices = @transform_0, window_bounds = array<i64: 8, 64>}, {pipeline_mode = #tpu.pipeline_mode<synchronous>, transform_indices = @transform_1, window_bounds = array<i64: 64, 32>}, {pipeline_mode = #tpu.pipeline_mode<synchronous>, transform_indices = @transform_2, window_bounds = array<i64: 1, 32>}, {pipeline_mode = #tpu.pipeline_mode<synchronous>, transform_indices = @transform_3, window_bounds = array<i64: 32, 32>}, {pipeline_mode = #tpu.pipeline_mode<synchronous>, transform_indices = @transform_4, window_bounds = array<i64: 1, 32>}, {pipeline_mode = #tpu.pipeline_mode<synchronous>, transform_indices = @transform_5, window_bounds = array<i64: 1, 32>}, {pipeline_mode = #tpu.pipeline_mode<synchronous>, transform_indices = @transform_6, window_bounds = array<i64: 1, 1>}, {transform_indices = @transform_7, window_bounds = array<i64: 1, 8>}]} {
    %c0 = arith.constant 0 : index
    %c0_0 = arith.constant 0 : index
    %0 = vector.load %arg1[%c0, %c0_0] : memref<8x64xf32, #tpu.memory_space<vmem>>, vector<8x64xf32>
    %1 = arith.truncf %0 : vector<8x64xf32> to vector<8x64xbf16>
    %c0_1 = arith.constant 0 : index
    %c0_2 = arith.constant 0 : index
    %2 = vector.load %arg2[%c0_1, %c0_2] : memref<64x32xbf16, #tpu.memory_space<vmem>>, vector<64x32xbf16>
    %cst = arith.constant dense<0.000000e+00> : vector<8x32xf32>
    %3 = tpu.matmul %1, %2, %cst {dimension_numbers = #tpu.dot_dimension_numbers<[1], [0], [0], [1], [0, 0, 1, 1], [], []>} : vector<8x64xbf16>, vector<64x32xbf16>, vector<8x32xf32> -> vector<8x32xf32>
    %c0_3 = arith.constant 0 : index
    %c0_4 = arith.constant 0 : index
    %4 = vector.load %arg3[%c0_3, %c0_4] : memref<1x32xf32, #tpu.memory_space<vmem>>, vector<1x32xf32>
    %5 = vector.broadcast %4 : vector<1x32xf32> to vector<8x32xf32>
    %6 = arith.addf %3, %5 : vector<8x32xf32>
    %cst_5 = arith.constant 0.000000e+00 : f32
    %7 = vector.broadcast %cst_5 : f32 to vector<8x32xf32>
    %8 = arith.cmpf ogt, %6, %7 : vector<8x32xf32>
    %cst_6 = arith.constant 0.00999999977 : f32
    %9 = vector.broadcast %cst_6 : f32 to vector<8x32xf32>
    %10 = arith.mulf %9, %6 : vector<8x32xf32>
    %11 = arith.select %8, %6, %10 : vector<8x32xi1>, vector<8x32xf32>
    %12 = arith.truncf %11 : vector<8x32xf32> to vector<8x32xbf16>
    %c0_7 = arith.constant 0 : index
    %c0_8 = arith.constant 0 : index
    %13 = vector.load %arg4[%c0_7, %c0_8] : memref<32x32xbf16, #tpu.memory_space<vmem>>, vector<32x32xbf16>
    %cst_9 = arith.constant dense<0.000000e+00> : vector<8x32xf32>
    %14 = tpu.matmul %12, %13, %cst_9 {dimension_numbers = #tpu.dot_dimension_numbers<[1], [0], [0], [1], [0, 0, 1, 1], [], []>} : vector<8x32xbf16>, vector<32x32xbf16>, vector<8x32xf32> -> vector<8x32xf32>
    %c0_10 = arith.constant 0 : index
    %c0_11 = arith.constant 0 : index
    %15 = vector.load %arg5[%c0_10, %c0_11] : memref<1x32xf32, #tpu.memory_space<vmem>>, vector<1x32xf32>
    %16 = vector.broadcast %15 : vector<1x32xf32> to vector<8x32xf32>
    %17 = arith.addf %14, %16 : vector<8x32xf32>
    %cst_12 = arith.constant 0.000000e+00 : f32
    %18 = vector.broadcast %cst_12 : f32 to vector<8x32xf32>
    %19 = arith.cmpf ogt, %17, %18 : vector<8x32xf32>
    %cst_13 = arith.constant 0.00999999977 : f32
    %20 = vector.broadcast %cst_13 : f32 to vector<8x32xf32>
    %21 = arith.mulf %20, %17 : vector<8x32xf32>
    %22 = arith.select %19, %17, %21 : vector<8x32xi1>, vector<8x32xf32>
    %c0_14 = arith.constant 0 : index
    %c0_15 = arith.constant 0 : index
    %23 = vector.load %arg6[%c0_14, %c0_15] : memref<1x32xf32, #tpu.memory_space<vmem>>, vector<1x32xf32>
    %24 = vector.broadcast %23 : vector<1x32xf32> to vector<8x32xf32>
    %25 = arith.mulf %22, %24 : vector<8x32xf32>
    %cst_16 = arith.constant dense<0.000000e+00> : vector<8xf32>
    %26 = vector.multi_reduction <add>, %25, %cst_16 [1] : vector<8x32xf32> to vector<8xf32>
    %27 = vector.shape_cast %26 : vector<8xf32> to vector<8x1xf32>
    %c0_17 = arith.constant 0 : index
    %c0_18 = arith.constant 0 : index
    %28 = vector.load %arg7[%c0_17, %c0_18] : memref<1x1xf32, #tpu.memory_space<vmem>>, vector<1x1xf32>
    %29 = vector.broadcast %28 : vector<1x1xf32> to vector<8x1xf32>
    %30 = arith.addf %27, %29 : vector<8x1xf32>
    %31 = tpu.transpose %30, [1, 0] : vector<8x1xf32> -> vector<1x8xf32>
    %c0_19 = arith.constant 0 : index
    %c0_20 = arith.constant 0 : index
    %32 = vector.load %arg8[%c0_19, %c0_20] : memref<1x8xf32, #tpu.memory_space<vmem>>, vector<1x8xf32>
    tpu.vector_store %arg8[%c0_19, %c0_20], %31 {strides = array<i32>} : memref<1x8xf32, #tpu.memory_space<vmem>>, vector<1x8xf32>,
    return
  }
  func.func @transform_0(%arg0: i32) -> (i32, i32) {
    %c0_i32 = arith.constant 0 : i32
    %c0_i32_0 = arith.constant 0 : i32
    return %arg0, %c0_i32 : i32, i32
  }
  func.func @transform_1(%arg0: i32) -> (i32, i32) {
    %c0_i32 = arith.constant 0 : i32
    %c0_i32_0 = arith.constant 0 : i32
    %c0_i32_1 = arith.constant 0 : i32
    return %c0_i32, %c0_i32_0 : i32, i32
  }
  func.func @transform_2(%arg0: i32) -> (i32, i32) {
    %c0_i32 = arith.constant 0 : i32
    %c0_i32_0 = arith.constant 0 : i32
    %c0_i32_1 = arith.constant 0 : i32
    return %c0_i32, %c0_i32_0 : i32, i32
  }
  func.func @transform_3(%arg0: i32) -> (i32, i32) {
    %c0_i32 = arith.constant 0 : i32
    %c0_i32_0 = arith.constant 0 : i32
    %c0_i32_1 = arith.constant 0 : i32
    return %c0_i32, %c0_i32_0 : i32, i32
  }
  func.func @transform_4(%arg0: i32) -> (i32, i32) {
    %c0_i32 = arith.constant 0 : i32
    %c0_i32_0 = arith.constant 0 : i32
    %c0_i32_1 = arith.constant 0 : i32
    return %c0_i32, %c0_i32_0 : i32, i32
  }
  func.func @transform_5(%arg0: i32) -> (i32, i32) {
    %c0_i32 = arith.constant 0 : i32
    %c0_i32_0 = arith.constant 0 : i32
    %c0_i32_1 = arith.constant 0 : i32
    return %c0_i32, %c0_i32_0 : i32, i32
  }
  func.func @transform_6(%arg0: i32) -> (i32, i32) {
    %c0_i32 = arith.constant 0 : i32
    %c0_i32_0 = arith.constant 0 : i32
    %c0_i32_1 = arith.constant 0 : i32
    return %c0_i32, %c0_i32_0 : i32, i32
  }
  func.func @transform_7(%arg0: i32) -> (i32, i32) {
    %c0_i32 = arith.constant 0 : i32
    %c0_i32_0 = arith.constant 0 : i32
    return %arg0, %c0_i32 : i32, i32
  }
}

module attributes {stable_mosaic.version = 11 : i64} {
  func.func @_critic_mlp_kernel(%arg0: i32, %arg1: memref<8x64xf32, #tpu.memory_space<vmem>>, %arg2: memref<64x32xbf16, #tpu.memory_space<vmem>>, %arg3: memref<1x32xf32, #tpu.memory_space<vmem>>, %arg4: memref<32x32xbf16, #tpu.memory_space<vmem>>, %arg5: memref<1x32xf32, #tpu.memory_space<vmem>>, %arg6: memref<1x32xf32, #tpu.memory_space<vmem>>, %arg7: memref<1x1xf32, #tpu.memory_space<vmem>>, %arg8: memref<1x8xf32, #tpu.memory_space<vmem>>) attributes {dimension_semantics = [#tpu.dimension_semantics<parallel>], iteration_bounds = array<i64: 1>, scalar_prefetch = 0 : i64, scratch_operands = 0 : i64, tpu.core_type = #tpu.core_type<tc>, window_params = [{transform_indices = @transform_0, window_bounds = array<i64: 8, 64>}, {pipeline_mode = #tpu.pipeline_mode<synchronous>, transform_indices = @transform_1, window_bounds = array<i64: 64, 32>}, {pipeline_mode = #tpu.pipeline_mode<synchronous>, transform_indices = @transform_2, window_bounds = array<i64: 1, 32>}, {pipeline_mode = #tpu.pipeline_mode<synchronous>, transform_indices = @transform_3, window_bounds = array<i64: 32, 32>}, {pipeline_mode = #tpu.pipeline_mode<synchronous>, transform_indices = @transform_4, window_bounds = array<i64: 1, 32>}, {pipeline_mode = #tpu.pipeline_mode<synchronous>, transform_indices = @transform_5, window_bounds = array<i64: 1, 32>}, {pipeline_mode = #tpu.pipeline_mode<synchronous>, transform_indices = @transform_6, window_bounds = array<i64: 1, 1>}, {transform_indices = @transform_7, window_bounds = array<i64: 1, 8>}]} {
    %c0 = arith.constant 0 : index
    %c0_0 = arith.constant 0 : index
    %0 = vector.load %arg1[%c0, %c0_0] : memref<8x64xf32, #tpu.memory_space<vmem>>, vector<8x64xf32>
    %1 = arith.truncf %0 : vector<8x64xf32> to vector<8x64xbf16>
    %c0_1 = arith.constant 0 : index
    %c0_2 = arith.constant 0 : index
    %2 = vector.load %arg2[%c0_1, %c0_2] : memref<64x32xbf16, #tpu.memory_space<vmem>>, vector<64x32xbf16>
    %cst = arith.constant dense<0.000000e+00> : vector<8x32xf32>
    %3 = tpu.matmul %1, %2, %cst {dimension_numbers = #tpu.dot_dimension_numbers<[1], [0], [0], [1], [0, 0, 1, 1], [], []>} : vector<8x64xbf16>, vector<64x32xbf16>, vector<8x32xf32> -> vector<8x32xf32>
    %c0_3 = arith.constant 0 : index
    %c0_4 = arith.constant 0 : index
    %4 = vector.load %arg3[%c0_3, %c0_4] : memref<1x32xf32, #tpu.memory_space<vmem>>, vector<1x32xf32>
    %5 = vector.broadcast %4 : vector<1x32xf32> to vector<8x32xf32>
    %6 = arith.addf %3, %5 : vector<8x32xf32>
    %cst_5 = arith.constant 0.000000e+00 : f32
    %7 = vector.broadcast %cst_5 : f32 to vector<8x32xf32>
    %8 = arith.cmpf ogt, %6, %7 : vector<8x32xf32>
    %cst_6 = arith.constant 0.00999999977 : f32
    %9 = vector.broadcast %cst_6 : f32 to vector<8x32xf32>
    %10 = arith.mulf %9, %6 : vector<8x32xf32>
    %11 = arith.select %8, %6, %10 : vector<8x32xi1>, vector<8x32xf32>
    %12 = arith.truncf %11 : vector<8x32xf32> to vector<8x32xbf16>
    %c0_7 = arith.constant 0 : index
    %c0_8 = arith.constant 0 : index
    %13 = vector.load %arg4[%c0_7, %c0_8] : memref<32x32xbf16, #tpu.memory_space<vmem>>, vector<32x32xbf16>
    %cst_9 = arith.constant dense<0.000000e+00> : vector<8x32xf32>
    %14 = tpu.matmul %12, %13, %cst_9 {dimension_numbers = #tpu.dot_dimension_numbers<[1], [0], [0], [1], [0, 0, 1, 1], [], []>} : vector<8x32xbf16>, vector<32x32xbf16>, vector<8x32xf32> -> vector<8x32xf32>
    %c0_10 = arith.constant 0 : index
    %c0_11 = arith.constant 0 : index
    %15 = vector.load %arg5[%c0_10, %c0_11] : memref<1x32xf32, #tpu.memory_space<vmem>>, vector<1x32xf32>
    %16 = vector.broadcast %15 : vector<1x32xf32> to vector<8x32xf32>
    %17 = arith.addf %14, %16 : vector<8x32xf32>
    %cst_12 = arith.constant 0.000000e+00 : f32
    %18 = vector.broadcast %cst_12 : f32 to vector<8x32xf32>
    %19 = arith.cmpf ogt, %17, %18 : vector<8x32xf32>
    %cst_13 = arith.constant 0.00999999977 : f32
    %20 = vector.broadcast %cst_13 : f32 to vector<8x32xf32>
    %21 = arith.mulf %20, %17 : vector<8x32xf32>
    %22 = arith.select %19, %17, %21 : vector<8x32xi1>, vector<8x32xf32>
    %c0_14 = arith.constant 0 : index
    %c0_15 = arith.constant 0 : index
    %23 = vector.load %arg6[%c0_14, %c0_15] : memref<1x32xf32, #tpu.memory_space<vmem>>, vector<1x32xf32>
    %24 = vector.broadcast %23 : vector<1x32xf32> to vector<8x32xf32>
    %25 = arith.mulf %22, %24 : vector<8x32xf32>
    %cst_16 = arith.constant dense<0.000000e+00> : vector<8xf32>
    %26 = vector.multi_reduction <add>, %25, %cst_16 [1] : vector<8x32xf32> to vector<8xf32>
    %27 = vector.shape_cast %26 : vector<8xf32> to vector<8x1xf32>
    %c0_17 = arith.constant 0 : index
    %c0_18 = arith.constant 0 : index
    %28 = vector.load %arg7[%c0_17, %c0_18] : memref<1x1xf32, #tpu.memory_space<vmem>>, vector<1x1xf32>
    %29 = vector.broadcast %28 : vector<1x1xf32> to vector<8x1xf32>
    %30 = arith.addf %27, %29 : vector<8x1xf32>
    %31 = tpu.transpose %30, [1, 0] : vector<8x1xf32> -> vector<1x8xf32>
    %c0_19 = arith.constant 0 : index
    %c0_20 = arith.constant 0 : index
    %32 = vector.load %arg8[%c0_19, %c0_20] : memref<1x8xf32, #tpu.memory_space<vmem>>, vector<1x8xf32>
    tpu.vector_store %arg8[%c0_19, %c0_20], %31 {strides = array<i32>} : memref<1x8xf32, #tpu.memory_space<vmem>>, vector<1x8xf32>,
    return
  }
  func.func @transform_0(%arg0: i32) -> (i32, i32) {
    %c0_i32 = arith.constant 0 : i32
    %c0_i32_0 = arith.constant 0 : i32
    return %arg0, %c0_i32 : i32, i32
  }
  func.func @transform_1(%arg0: i32) -> (i32, i32) {
    %c0_i32 = arith.constant 0 : i32
    %c0_i32_0 = arith.constant 0 : i32
    %c0_i32_1 = arith.constant 0 : i32
    return %c0_i32, %c0_i32_0 : i32, i32
  }
  func.func @transform_2(%arg0: i32) -> (i32, i32) {
    %c0_i32 = arith.constant 0 : i32
    %c0_i32_0 = arith.constant 0 : i32
    %c0_i32_1 = arith.constant 0 : i32
    return %c0_i32, %c0_i32_0 : i32, i32
  }
  func.func @transform_3(%arg0: i32) -> (i32, i32) {
    %c0_i32 = arith.constant 0 : i32
    %c0_i32_0 = arith.constant 0 : i32
    %c0_i32_1 = arith.constant 0 : i32
    return %c0_i32, %c0_i32_0 : i32, i32
  }
  func.func @transform_4(%arg0: i32) -> (i32, i32) {
    %c0_i32 = arith.constant 0 : i32
    %c0_i32_0 = arith.constant 0 : i32
    %c0_i32_1 = arith.constant 0 : i32
    return %c0_i32, %c0_i32_0 : i32, i32
  }
  func.func @transform_5(%arg0: i32) -> (i32, i32) {
    %c0_i32 = arith.constant 0 : i32
    %c0_i32_0 = arith.constant 0 : i32
    %c0_i32_1 = arith.constant 0 : i32
    return %c0_i32, %c0_i32_0 : i32, i32
  }
  func.func @transform_6(%arg0: i32) -> (i32, i32) {
    %c0_i32 = arith.constant 0 : i32
    %c0_i32_0 = arith.constant 0 : i32
    %c0_i32_1 = arith.constant 0 : i32
    return %c0_i32, %c0_i32_0 : i32, i32
  }
  func.func @transform_7(%arg0: i32) -> (i32, i32) {
    %c0_i32 = arith.constant 0 : i32
    %c0_i32_0 = arith.constant 0 : i32
    return %arg0, %c0_i32 : i32, i32
  }
}

</mosaic_0001>

<llo_original>
// kernel: _forward.1
$region0: #{_forward.1}
  #allocation0 [shape = 'u32[]', space=smem, size = 0x4, offset = 0x4, fixed_abs, tag = 'smem constant byte address 0x4 - core index']
  #allocation1 [shape = 'u32[144,128]{1,0:T(1,128)}', space=vmem, size = 0x12000, scoped, tag = 'internal scratch']
  #allocation2 [shape = 'f32[1,1]{1,0:T(1,128)S(1)}', space=vmem, size = 0x200, scoped, tag = 'scoped memory for _forward.1']
  %s0 = inlined_call_operand.vmem [shape: f32[8,64], index: 0, kind: input, shape index: {}]
  %s1 = inlined_call_operand.vmem [shape: bf16[64,32], index: 1, kind: input, shape index: {}]
  %s2 = inlined_call_operand.vmem [shape: f32[1,32], index: 2, kind: input, shape index: {}]
  %s3 = inlined_call_operand.vmem [shape: bf16[32,32], index: 3, kind: input, shape index: {}]
  %s4 = inlined_call_operand.vmem [shape: f32[1,32], index: 4, kind: input, shape index: {}]
  %s5 = inlined_call_operand.vmem [shape: f32[1,32], index: 5, kind: input, shape index: {}]
  %s6 = inlined_call_operand.<no memory space> [shape: f32[1,1], index: 6, kind: input, shape index: {}]
  %s7 = inlined_call_operand.vmem [shape: f32[1,8], index: 7, kind: output, shape index: {}]
  %s8 = sld [smem:[#allocation0]]
  $region38: #{_forward.1} parent=0
    _
  %s10 = ssub.s32 1, %s8
  %s11 = scalar_select 0, %s10, %s8
  %v12 = vstv %s6
  %13 = vst [vmem:[#allocation2] sm:$0x1] %v12
  // Predicated region
  $region2: #{_forward.1} parent=0 // pred_check
    _
  $region3: #{_forward.1} parent=0 // pred_check_branch
    %15 = sbr.rel (0) target = $region5
  $region4: #{_forward.1} parent=0 // pred_region
    _
  $region5: #{_forward.1} parent=0 // pred_fallthru
    _
  // Predicated region
  $region6: #{_forward.1} parent=0 // pred_check
    _
  $region7: #{_forward.1} parent=0 // pred_check_branch
    %17 = sbr.rel (0) target = $region9
  $region8: #{_forward.1} parent=0 // pred_region
    _
  $region9: #{_forward.1} parent=0 // pred_fallthru
    _
  // Predicated region
  $region10: #{_forward.1} parent=0 // pred_check
    _
  $region11: #{_forward.1} parent=0 // pred_check_branch
    %19 = sbr.rel (0) target = $region13
  $region12: #{_forward.1} parent=0 // pred_region
    _
  $region13: #{_forward.1} parent=0 // pred_fallthru
    _
  // Predicated region
  $region14: #{_forward.1} parent=0 // pred_check
    _
  $region15: #{_forward.1} parent=0 // pred_check_branch
    %21 = sbr.rel (0) target = $region17
  $region16: #{_forward.1} parent=0 // pred_region
    _
  $region17: #{_forward.1} parent=0 // pred_fallthru
    _
  // Predicated region
  $region18: #{_forward.1} parent=0 // pred_check
    _
  $region19: #{_forward.1} parent=0 // pred_check_branch
    %23 = sbr.rel (0) target = $region21
  $region20: #{_forward.1} parent=0 // pred_region
    _
  $region21: #{_forward.1} parent=0 // pred_fallthru
    _
  // Predicated region
  $region22: #{_forward.1} parent=0 // pred_check
    _
  $region23: #{_forward.1} parent=0 // pred_check_branch
    %25 = sbr.rel (0) target = $region25
  $region24: #{_forward.1} parent=0 // pred_region
    _
  $region25: #{_forward.1} parent=0 // pred_fallthru
    _
  // Predicated region
  $region26: #{_forward.1} parent=0 // pred_check
    _
  $region27: #{_forward.1} parent=0 // pred_check_branch
    %27 = sbr.rel (0) target = $region29
  $region28: #{_forward.1} parent=0 // pred_region
    _
  $region29: #{_forward.1} parent=0 // pred_fallthru
    _
  %v29 = vld [vmem:[%s0] sm:$0xff]
  %v30 = vpack.c.bf16 %v29, %v29
  %v31 = vld [vmem:[%s1] sm:$0xf]
  %v32 = vld [vmem:[%s1 + $0x4] sm:$0xf]
  %v33 = vld [vmem:[%s1 + $0x8] sm:$0xf]
  %v34 = vld [vmem:[%s1 + $0xc] sm:$0xf]
  %v35 = vld [vmem:[%s1 + $0x10] sm:$0xf]
  %v36 = vld [vmem:[%s1 + $0x14] sm:$0xf]
  %v37 = vld [vmem:[%s1 + $0x18] sm:$0xf]
  %v38 = vld [vmem:[%s1 + $0x1c] sm:$0xf]
  %v39 = vld [vmem:[%s2] sm:$0x1]
  %v41 = vlaneseq
  %v42 = vshrl.u32 %v41, 7
  %v43 = vsub.s32 0, %v42
  %v44 = vrot.slane %v39, %v43
  %v54 = vunpack.c.l.b16 %v31
  %v55 = vunpack.c.l.b16 %v32
  %v56 = vunpack.c.l.b16 %v33
  %v57 = vunpack.c.l.b16 %v34
  %v58 = vunpack.c.l.b16 %v35
  %v59 = vunpack.c.l.b16 %v36
  %v60 = vunpack.c.l.b16 %v37
  %v61 = vunpack.c.l.b16 %v38
  %v62 = vpack.c.b16 %v55, %v54
  %v63 = vpack.c.b16 %v57, %v56
  %v64 = vpack.c.b16 %v59, %v58
  %v65 = vpack.c.b16 %v61, %v60
  %vm70 = vcmask 523264
  %v72 = vsel %vm70, %v30, 0
  %74 = vmatprep.subr.bf16.mxu0 0
  %75 = vmatpush1.bf16.msra.mxu0 0
  %76 = vmatprep.subr.bf16.mxu0 0
  %77 = vmatpush1.bf16.msra.mxu0 0
  %78 = vmatprep.subr.bf16.mxu0 0
  %79 = vmatpush1.bf16.msra.mxu0 0
  %80 = vmatprep.subr.bf16.mxu0 0
  %81 = vmatpush1.bf16.msra.mxu0 0
  %82 = vmatprep.subr.bf16.mxu0 0
  %83 = vmatpush1.bf16.msra.mxu0 %v65
  %84 = vmatprep.subr.bf16.mxu0 0
  %85 = vmatpush1.bf16.msra.mxu0 %v64
  %86 = vmatprep.subr.bf16.mxu0 0
  %87 = vmatpush1.bf16.msra.mxu0 %v63
  %88 = vmatprep.subr.bf16.mxu0 0
  %89 = vmatpush1.bf16.msra.mxu0 %v62
  %90 = vmatprep.subr.bf16.mxu0 0
  %91 = vmatpush2.bf16.msra.mxu0 0
  %92 = vmatprep.subr.bf16.mxu0 0
  %93 = vmatpush2.bf16.msra.mxu0 0
  %94 = vmatprep.subr.bf16.mxu0 0
  %95 = vmatpush2.bf16.msra.mxu0 0
  %96 = vmatprep.subr.bf16.mxu0 0
  %97 = vmatpush2.bf16.msra.mxu0 0
  %98 = vmatprep.subr.bf16.mxu0 0
  %99 = vmatpush2.bf16.msra.mxu0 0
  %100 = vmatprep.subr.bf16.mxu0 0
  %101 = vmatpush2.bf16.msra.mxu0 0
  %102 = vmatprep.subr.bf16.mxu0 0
  %103 = vmatpush2.bf16.msra.mxu0 0
  %104 = vmatprep.subr.bf16.mxu0 0
  %105 = vmatpush2.bf16.msra.mxu0 0
  %106 = vmatprep.mubr.bf16.mxu0 0
  %107 = vmatmul.mubr.bf16.gmra.mxu0 %v72
  %v108 = vpop.f32.mrf.mxu0
  %v109 = vadd.f32 %v44, %v108
  %v110 = vpop.f32.mrf.mxu0
  %v111 = vpop.f32.mrf.mxu0
  %v112 = vpop.f32.mrf.mxu0
  %113 = vdwg.mxu0
  %vm114 = vcmp.gt.f32.partialorder %v109, 0.0
  %v115 = vmul.f32 %v109, 0.01
  %v116 = vsel %vm114, %v109, %v115
  %v117 = vpack.c.bf16 %v116, %v116
  %v118 = vld [vmem:[%s3] sm:$0xf]
  %v119 = vld [vmem:[%s3 + $0x4] sm:$0xf]
  %v120 = vld [vmem:[%s3 + $0x8] sm:$0xf]
  %v121 = vld [vmem:[%s3 + $0xc] sm:$0xf]
  %v122 = vld [vmem:[%s4] sm:$0x1]
  %v124 = vlaneseq
  %v125 = vshrl.u32 %v124, 7
  %v126 = vsub.s32 0, %v125
  %v127 = vrot.slane %v122, %v126
  %v133 = vunpack.c.l.b16 %v118
  %v134 = vunpack.c.l.b16 %v119
  %v135 = vunpack.c.l.b16 %v120
  %v136 = vunpack.c.l.b16 %v121
  %v137 = vpack.c.b16 %v134, %v133
  %v138 = vpack.c.b16 %v136, %v135
  %vm141 = vcmask 261120
  %v143 = vsel %vm141, %v117, 0
  %145 = vmatprep.subr.bf16.mxu0 0
  %146 = vmatpush1.bf16.msra.mxu0 0
  %147 = vmatprep.subr.bf16.mxu0 0
  %148 = vmatpush1.bf16.msra.mxu0 0
  %149 = vmatprep.subr.bf16.mxu0 0
  %150 = vmatpush1.bf16.msra.mxu0 0
  %151 = vmatprep.subr.bf16.mxu0 0
  %152 = vmatpush1.bf16.msra.mxu0 0
  %153 = vmatprep.subr.bf16.mxu0 0
  %154 = vmatpush1.bf16.msra.mxu0 0
  %155 = vmatprep.subr.bf16.mxu0 0
  %156 = vmatpush1.bf16.msra.mxu0 0
  %157 = vmatprep.subr.bf16.mxu0 0
  %158 = vmatpush1.bf16.msra.mxu0 %v138
  %159 = vmatprep.subr.bf16.mxu0 0
  %160 = vmatpush1.bf16.msra.mxu0 %v137
  %161 = vmatprep.subr.bf16.mxu0 0
  %162 = vmatpush2.bf16.msra.mxu0 0
  %163 = vmatprep.subr.bf16.mxu0 0
  %164 = vmatpush2.bf16.msra.mxu0 0
  %165 = vmatprep.subr.bf16.mxu0 0
  %166 = vmatpush2.bf16.msra.mxu0 0
  %167 = vmatprep.subr.bf16.mxu0 0
  %168 = vmatpush2.bf16.msra.mxu0 0
  %169 = vmatprep.subr.bf16.mxu0 0
  %170 = vmatpush2.bf16.msra.mxu0 0
  %171 = vmatprep.subr.bf16.mxu0 0
  %172 = vmatpush2.bf16.msra.mxu0 0
  %173 = vmatprep.subr.bf16.mxu0 0
  %174 = vmatpush2.bf16.msra.mxu0 0
  %175 = vmatprep.subr.bf16.mxu0 0
  %176 = vmatpush2.bf16.msra.mxu0 0
  %177 = vmatprep.mubr.bf16.mxu0 0
  %178 = vmatmul.mubr.bf16.gmra.mxu0 %v143
  %v179 = vpop.f32.mrf.mxu0
  %v180 = vadd.f32 %v127, %v179
  %v181 = vpop.f32.mrf.mxu0
  %v182 = vpop.f32.mrf.mxu0
  %v183 = vpop.f32.mrf.mxu0
  %184 = vdwg.mxu0
  %vm185 = vcmp.gt.f32.partialorder %v180, 0.0
  %v186 = vmul.f32 %v180, 0.01
  %v187 = vsel %vm185, %v180, %v186
  %v188 = vld [vmem:[%s5] sm:$0x1]
  %v190 = vlaneseq
  %v191 = vshrl.u32 %v190, 7
  %v192 = vsub.s32 0, %v191
  %v193 = vrot.slane %v188, %v192
  %v195 = vmul.f32 %v187, %v193
  %v196 = vsel %vm141, %v195, 0.0
  %197 = vadd.xlane.f32.xlu0 %v196
  %v198 = vpop.xlane.xlu0 %197
  %v199 = vld [vmem:[#allocation2] sm:$0x1]
  %v201 = vlaneseq
  %v202 = vshrl.u32 %v201, 7
  %v203 = vsub.s32 0, %v202
  %v204 = vrot.slane %v199, %v203
  %v206 = vadd.f32 %v198, %v204
  %207 = vxpose.xlu0.b32.start [1/16] %v206, 128
  %208 = vxpose.xlu0.b32.cont [2/16] 0.0, 128
  %209 = vxpose.xlu0.b32.cont [3/16] 0.0, 128
  %210 = vxpose.xlu0.b32.cont [4/16] 0.0, 128
  %211 = vxpose.xlu0.b32.cont [5/16] 0.0, 128
  %212 = vxpose.xlu0.b32.cont [6/16] 0.0, 128
  %213 = vxpose.xlu0.b32.cont [7/16] 0.0, 128
  %214 = vxpose.xlu0.b32.cont [8/16] 0.0, 128
  %215 = vxpose.xlu0.b32.cont [9/16] 0.0, 128
  %216 = vxpose.xlu0.b32.cont [10/16] 0.0, 128
  %217 = vxpose.xlu0.b32.cont [11/16] 0.0, 128
  %218 = vxpose.xlu0.b32.cont [12/16] 0.0, 128
  %219 = vxpose.xlu0.b32.cont [13/16] 0.0, 128
  %220 = vxpose.xlu0.b32.cont [14/16] 0.0, 128
  %221 = vxpose.xlu0.b32.cont [15/16] 0.0, 128
  %222 = vxpose.xlu0.b32.end [16/16] 0.0, 128
  %v223 = vpop.trf.xlu0
  %v224 = vpop.trf.xlu0
  %v225 = vpop.trf.xlu0
  %v226 = vpop.trf.xlu0
  %v227 = vpop.trf.xlu0
  %v228 = vpop.trf.xlu0
  %v229 = vpop.trf.xlu0
  %v230 = vpop.trf.xlu0
  %v231 = vpop.trf.xlu0
  %v232 = vpop.trf.xlu0
  %v233 = vpop.trf.xlu0
  %v234 = vpop.trf.xlu0
  %v235 = vpop.trf.xlu0
  %v236 = vpop.trf.xlu0
  %v237 = vpop.trf.xlu0
  %v238 = vpop.trf.xlu0
  %vm239 = vcmask 57344
  %240 = vst.msk [vmem:[%s7] sm:$0x1] %vm239, %v223
  // Predicated region
  $region30: #{_forward.1} parent=0 // pred_check
    _
  $region31: #{_forward.1} parent=0 // pred_check_branch
    %242 = sbr.rel (0) target = $region33
  $region32: #{_forward.1} parent=0 // pred_region
    _
  $region33: #{_forward.1} parent=0 // pred_fallthru
    _
  // Predicated region
  $region34: #{_forward.1} parent=0 // pred_check
    _
  $region35: #{_forward.1} parent=0 // pred_check_branch
    %244 = sbr.rel (0) target = $region37
  $region36: #{_forward.1} parent=0 // pred_region
    _
  $region37: #{_forward.1} parent=0 // pred_fallthru
    _

// kernel: _forward.1
$region0: #{_forward.1}
  #allocation0 [shape = 'u32[]', space=smem, size = 0x4, offset = 0x4, fixed_abs, tag = 'smem constant byte address 0x4 - core index']
  #allocation1 [shape = 'u32[144,128]{1,0:T(1,128)}', space=vmem, size = 0x12000, scoped, tag = 'internal scratch']
  #allocation2 [shape = 'f32[1,1]{1,0:T(1,128)S(1)}', space=vmem, size = 0x200, scoped, tag = 'scoped memory for _forward.1']
  %s0 = inlined_call_operand.vmem [shape: f32[8,64], index: 0, kind: input, shape index: {}]
  %s1 = inlined_call_operand.vmem [shape: bf16[64,32], index: 1, kind: input, shape index: {}]
  %s2 = inlined_call_operand.vmem [shape: f32[1,32], index: 2, kind: input, shape index: {}]
  %s3 = inlined_call_operand.vmem [shape: bf16[32,32], index: 3, kind: input, shape index: {}]
  %s4 = inlined_call_operand.vmem [shape: f32[1,32], index: 4, kind: input, shape index: {}]
  %s5 = inlined_call_operand.vmem [shape: f32[1,32], index: 5, kind: input, shape index: {}]
  %s6 = inlined_call_operand.<no memory space> [shape: f32[1,1], index: 6, kind: input, shape index: {}]
  %s7 = inlined_call_operand.vmem [shape: f32[1,8], index: 7, kind: output, shape index: {}]
  %s8 = sld [smem:[#allocation0]]
  $region38: #{_forward.1} parent=0
    _
  %s10 = ssub.s32 1, %s8
  %s11 = scalar_select 0, %s10, %s8
  %v12 = vstv %s6
  %13 = vst [vmem:[#allocation2] sm:$0x1] %v12
  // Predicated region
  $region2: #{_forward.1} parent=0 // pred_check
    _
  $region3: #{_forward.1} parent=0 // pred_check_branch
    %15 = sbr.rel (0) target = $region5
  $region4: #{_forward.1} parent=0 // pred_region
    _
  $region5: #{_forward.1} parent=0 // pred_fallthru
    _
  // Predicated region
  $region6: #{_forward.1} parent=0 // pred_check
    _
  $region7: #{_forward.1} parent=0 // pred_check_branch
    %17 = sbr.rel (0) target = $region9
  $region8: #{_forward.1} parent=0 // pred_region
    _
  $region9: #{_forward.1} parent=0 // pred_fallthru
    _
  // Predicated region
  $region10: #{_forward.1} parent=0 // pred_check
    _
  $region11: #{_forward.1} parent=0 // pred_check_branch
    %19 = sbr.rel (0) target = $region13
  $region12: #{_forward.1} parent=0 // pred_region
    _
  $region13: #{_forward.1} parent=0 // pred_fallthru
    _
  // Predicated region
  $region14: #{_forward.1} parent=0 // pred_check
    _
  $region15: #{_forward.1} parent=0 // pred_check_branch
    %21 = sbr.rel (0) target = $region17
  $region16: #{_forward.1} parent=0 // pred_region
    _
  $region17: #{_forward.1} parent=0 // pred_fallthru
    _
  // Predicated region
  $region18: #{_forward.1} parent=0 // pred_check
    _
  $region19: #{_forward.1} parent=0 // pred_check_branch
    %23 = sbr.rel (0) target = $region21
  $region20: #{_forward.1} parent=0 // pred_region
    _
  $region21: #{_forward.1} parent=0 // pred_fallthru
    _
  // Predicated region
  $region22: #{_forward.1} parent=0 // pred_check
    _
  $region23: #{_forward.1} parent=0 // pred_check_branch
    %25 = sbr.rel (0) target = $region25
  $region24: #{_forward.1} parent=0 // pred_region
    _
  $region25: #{_forward.1} parent=0 // pred_fallthru
    _
  // Predicated region
  $region26: #{_forward.1} parent=0 // pred_check
    _
  $region27: #{_forward.1} parent=0 // pred_check_branch
    %27 = sbr.rel (0) target = $region29
  $region28: #{_forward.1} parent=0 // pred_region
    _
  $region29: #{_forward.1} parent=0 // pred_fallthru
    _
  %v29 = vld [vmem:[%s0] sm:$0xff]
  %v30 = vpack.c.bf16 %v29, %v29
  %v31 = vld [vmem:[%s1] sm:$0xf]
  %v32 = vld [vmem:[%s1 + $0x4] sm:$0xf]
  %v33 = vld [vmem:[%s1 + $0x8] sm:$0xf]
  %v34 = vld [vmem:[%s1 + $0xc] sm:$0xf]
  %v35 = vld [vmem:[%s1 + $0x10] sm:$0xf]
  %v36 = vld [vmem:[%s1 + $0x14] sm:$0xf]
  %v37 = vld [vmem:[%s1 + $0x18] sm:$0xf]
  %v38 = vld [vmem:[%s1 + $0x1c] sm:$0xf]
  %v39 = vld [vmem:[%s2] sm:$0x1]
  %v41 = vlaneseq
  %v42 = vshrl.u32 %v41, 7
  %v43 = vsub.s32 0, %v42
  %v44 = vrot.slane %v39, %v43
  %v54 = vunpack.c.l.b16 %v31
  %v55 = vunpack.c.l.b16 %v32
  %v56 = vunpack.c.l.b16 %v33
  %v57 = vunpack.c.l.b16 %v34
  %v58 = vunpack.c.l.b16 %v35
  %v59 = vunpack.c.l.b16 %v36
  %v60 = vunpack.c.l.b16 %v37
  %v61 = vunpack.c.l.b16 %v38
  %v62 = vpack.c.b16 %v55, %v54
  %v63 = vpack.c.b16 %v57, %v56
  %v64 = vpack.c.b16 %v59, %v58
  %v65 = vpack.c.b16 %v61, %v60
  %vm70 = vcmask 523264
  %v72 = vsel %vm70, %v30, 0
  %74 = vmatprep.subr.bf16.mxu0 0
  %75 = vmatpush1.bf16.msra.mxu0 0
  %76 = vmatprep.subr.bf16.mxu0 0
  %77 = vmatpush1.bf16.msra.mxu0 0
  %78 = vmatprep.subr.bf16.mxu0 0
  %79 = vmatpush1.bf16.msra.mxu0 0
  %80 = vmatprep.subr.bf16.mxu0 0
  %81 = vmatpush1.bf16.msra.mxu0 0
  %82 = vmatprep.subr.bf16.mxu0 0
  %83 = vmatpush1.bf16.msra.mxu0 %v65
  %84 = vmatprep.subr.bf16.mxu0 0
  %85 = vmatpush1.bf16.msra.mxu0 %v64
  %86 = vmatprep.subr.bf16.mxu0 0
  %87 = vmatpush1.bf16.msra.mxu0 %v63
  %88 = vmatprep.subr.bf16.mxu0 0
  %89 = vmatpush1.bf16.msra.mxu0 %v62
  %90 = vmatprep.subr.bf16.mxu0 0
  %91 = vmatpush2.bf16.msra.mxu0 0
  %92 = vmatprep.subr.bf16.mxu0 0
  %93 = vmatpush2.bf16.msra.mxu0 0
  %94 = vmatprep.subr.bf16.mxu0 0
  %95 = vmatpush2.bf16.msra.mxu0 0
  %96 = vmatprep.subr.bf16.mxu0 0
  %97 = vmatpush2.bf16.msra.mxu0 0
  %98 = vmatprep.subr.bf16.mxu0 0
  %99 = vmatpush2.bf16.msra.mxu0 0
  %100 = vmatprep.subr.bf16.mxu0 0
  %101 = vmatpush2.bf16.msra.mxu0 0
  %102 = vmatprep.subr.bf16.mxu0 0
  %103 = vmatpush2.bf16.msra.mxu0 0
  %104 = vmatprep.subr.bf16.mxu0 0
  %105 = vmatpush2.bf16.msra.mxu0 0
  %106 = vmatprep.mubr.bf16.mxu0 0
  %107 = vmatmul.mubr.bf16.gmra.mxu0 %v72
  %v108 = vpop.f32.mrf.mxu0
  %v109 = vadd.f32 %v44, %v108
  %v110 = vpop.f32.mrf.mxu0
  %v111 = vpop.f32.mrf.mxu0
  %v112 = vpop.f32.mrf.mxu0
  %113 = vdwg.mxu0
  %vm114 = vcmp.gt.f32.partialorder %v109, 0.0
  %v115 = vmul.f32 %v109, 0.01
  %v116 = vsel %vm114, %v109, %v115
  %v117 = vpack.c.bf16 %v116, %v116
  %v118 = vld [vmem:[%s3] sm:$0xf]
  %v119 = vld [vmem:[%s3 + $0x4] sm:$0xf]
  %v120 = vld [vmem:[%s3 + $0x8] sm:$0xf]
  %v121 = vld [vmem:[%s3 + $0xc] sm:$0xf]
  %v122 = vld [vmem:[%s4] sm:$0x1]
  %v124 = vlaneseq
  %v125 = vshrl.u32 %v124, 7
  %v126 = vsub.s32 0, %v125
  %v127 = vrot.slane %v122, %v126
  %v133 = vunpack.c.l.b16 %v118
  %v134 = vunpack.c.l.b16 %v119
  %v135 = vunpack.c.l.b16 %v120
  %v136 = vunpack.c.l.b16 %v121
  %v137 = vpack.c.b16 %v134, %v133
  %v138 = vpack.c.b16 %v136, %v135
  %vm141 = vcmask 261120
  %v143 = vsel %vm141, %v117, 0
  %145 = vmatprep.subr.bf16.mxu0 0
  %146 = vmatpush1.bf16.msra.mxu0 0
  %147 = vmatprep.subr.bf16.mxu0 0
  %148 = vmatpush1.bf16.msra.mxu0 0
  %149 = vmatprep.subr.bf16.mxu0 0
  %150 = vmatpush1.bf16.msra.mxu0 0
  %151 = vmatprep.subr.bf16.mxu0 0
  %152 = vmatpush1.bf16.msra.mxu0 0
  %153 = vmatprep.subr.bf16.mxu0 0
  %154 = vmatpush1.bf16.msra.mxu0 0
  %155 = vmatprep.subr.bf16.mxu0 0
  %156 = vmatpush1.bf16.msra.mxu0 0
  %157 = vmatprep.subr.bf16.mxu0 0
  %158 = vmatpush1.bf16.msra.mxu0 %v138
  %159 = vmatprep.subr.bf16.mxu0 0
  %160 = vmatpush1.bf16.msra.mxu0 %v137
  %161 = vmatprep.subr.bf16.mxu0 0
  %162 = vmatpush2.bf16.msra.mxu0 0
  %163 = vmatprep.subr.bf16.mxu0 0
  %164 = vmatpush2.bf16.msra.mxu0 0
  %165 = vmatprep.subr.bf16.mxu0 0
  %166 = vmatpush2.bf16.msra.mxu0 0
  %167 = vmatprep.subr.bf16.mxu0 0
  %168 = vmatpush2.bf16.msra.mxu0 0
  %169 = vmatprep.subr.bf16.mxu0 0
  %170 = vmatpush2.bf16.msra.mxu0 0
  %171 = vmatprep.subr.bf16.mxu0 0
  %172 = vmatpush2.bf16.msra.mxu0 0
  %173 = vmatprep.subr.bf16.mxu0 0
  %174 = vmatpush2.bf16.msra.mxu0 0
  %175 = vmatprep.subr.bf16.mxu0 0
  %176 = vmatpush2.bf16.msra.mxu0 0
  %177 = vmatprep.mubr.bf16.mxu0 0
  %178 = vmatmul.mubr.bf16.gmra.mxu0 %v143
  %v179 = vpop.f32.mrf.mxu0
  %v180 = vadd.f32 %v127, %v179
  %v181 = vpop.f32.mrf.mxu0
  %v182 = vpop.f32.mrf.mxu0
  %v183 = vpop.f32.mrf.mxu0
  %184 = vdwg.mxu0
  %vm185 = vcmp.gt.f32.partialorder %v180, 0.0
  %v186 = vmul.f32 %v180, 0.01
  %v187 = vsel %vm185, %v180, %v186
  %v188 = vld [vmem:[%s5] sm:$0x1]
  %v190 = vlaneseq
  %v191 = vshrl.u32 %v190, 7
  %v192 = vsub.s32 0, %v191
  %v193 = vrot.slane %v188, %v192
  %v195 = vmul.f32 %v187, %v193
  %v196 = vsel %vm141, %v195, 0.0
  %197 = vadd.xlane.f32.xlu0 %v196
  %v198 = vpop.xlane.xlu0 %197
  %v199 = vld [vmem:[#allocation2] sm:$0x1]
  %v201 = vlaneseq
  %v202 = vshrl.u32 %v201, 7
  %v203 = vsub.s32 0, %v202
  %v204 = vrot.slane %v199, %v203
  %v206 = vadd.f32 %v198, %v204
  %207 = vxpose.xlu0.b32.start [1/16] %v206, 128
  %208 = vxpose.xlu0.b32.cont [2/16] 0.0, 128
  %209 = vxpose.xlu0.b32.cont [3/16] 0.0, 128
  %210 = vxpose.xlu0.b32.cont [4/16] 0.0, 128
  %211 = vxpose.xlu0.b32.cont [5/16] 0.0, 128
  %212 = vxpose.xlu0.b32.cont [6/16] 0.0, 128
  %213 = vxpose.xlu0.b32.cont [7/16] 0.0, 128
  %214 = vxpose.xlu0.b32.cont [8/16] 0.0, 128
  %215 = vxpose.xlu0.b32.cont [9/16] 0.0, 128
  %216 = vxpose.xlu0.b32.cont [10/16] 0.0, 128
  %217 = vxpose.xlu0.b32.cont [11/16] 0.0, 128
  %218 = vxpose.xlu0.b32.cont [12/16] 0.0, 128
  %219 = vxpose.xlu0.b32.cont [13/16] 0.0, 128
  %220 = vxpose.xlu0.b32.cont [14/16] 0.0, 128
  %221 = vxpose.xlu0.b32.cont [15/16] 0.0, 128
  %222 = vxpose.xlu0.b32.end [16/16] 0.0, 128
  %v223 = vpop.trf.xlu0
  %v224 = vpop.trf.xlu0
  %v225 = vpop.trf.xlu0
  %v226 = vpop.trf.xlu0
  %v227 = vpop.trf.xlu0
  %v228 = vpop.trf.xlu0
  %v229 = vpop.trf.xlu0
  %v230 = vpop.trf.xlu0
  %v231 = vpop.trf.xlu0
  %v232 = vpop.trf.xlu0
  %v233 = vpop.trf.xlu0
  %v234 = vpop.trf.xlu0
  %v235 = vpop.trf.xlu0
  %v236 = vpop.trf.xlu0
  %v237 = vpop.trf.xlu0
  %v238 = vpop.trf.xlu0
  %vm239 = vcmask 57344
  %240 = vst.msk [vmem:[%s7] sm:$0x1] %vm239, %v223
  // Predicated region
  $region30: #{_forward.1} parent=0 // pred_check
    _
  $region31: #{_forward.1} parent=0 // pred_check_branch
    %242 = sbr.rel (0) target = $region33
  $region32: #{_forward.1} parent=0 // pred_region
    _
  $region33: #{_forward.1} parent=0 // pred_fallthru
    _
  // Predicated region
  $region34: #{_forward.1} parent=0 // pred_check
    _
  $region35: #{_forward.1} parent=0 // pred_check_branch
    %244 = sbr.rel (0) target = $region37
  $region36: #{_forward.1} parent=0 // pred_region
    _
  $region37: #{_forward.1} parent=0 // pred_fallthru
    _

</llo_original>
